<compile_context>
chip_gen: v7x
topology: tpu7x:2x2x1
jax: 0.10.0
libtpu: 0.0.40
codegen_flags: <defaults>
</compile_context>

<pallas_src>
import functools
import math

import jax
import jax.numpy as jnp
from jax.experimental import pallas as pl
from jax.experimental.pallas import tpu as pltpu


def _round_up(a, m):
    return (a + m - 1) // m * m


def _wml_kernel(*refs, gamma, loss_lambda, m_plus, m_minus,
                use_weights, labels_are_indices, num_classes, k):
    # Unpack refs depending on which optional inputs exist.
    if use_weights:
        x_ref, lab_ref, w_ref, out_ref = refs
    else:
        x_ref, lab_ref, out_ref = refs
        w_ref = None

    i = pl.program_id(1)

    @pl.when(i == 0)
    def _():
        out_ref[...] = jnp.zeros_like(out_ref)

    x = x_ref[...].astype(jnp.float32)
    tr, cw = x.shape

    if labels_are_indices:
        # Build the one-hot labels in-kernel: packed row holds k original rows of C
        # classes each; sub-row j's "hot" lane is j*C + cls. Padded rows carry a
        # large-negative sentinel index so they never match (and contribute 0).
        lane = jax.lax.broadcasted_iota(jnp.int32, (tr, cw), 1)
        y = jnp.zeros((tr, cw), jnp.float32)
        for j in range(k):
            tgt = lab_ref[:, j:j + 1] + (j * num_classes)   # (tr, 1) int32
            y = jnp.where(lane == tgt, 1.0, y)
    else:
        y = lab_ref[...].astype(jnp.float32)

    # margin loss: y * relu(m+ - x)^2 + lambda * (1 - y) * relu(x - m-)^2
    pos = jnp.maximum(m_plus - x, 0.0)
    neg = jnp.maximum(x - m_minus, 0.0)
    L = y * (pos * pos) + loss_lambda * (1.0 - y) * (neg * neg)

    # focal modulation (gamma is a static Python float)
    if gamma > 0:
        u = 1.0 - (x * y + (1.0 - x) * (1.0 - y))
        gi = int(round(gamma))
        if abs(gamma - gi) < 1e-12 and 1 <= gi <= 8:
            # integer exponent -> repeated VPU multiplies, no EUP transcendentals
            m = u
            for _ in range(gi - 1):
                m = m * u
            L = L * m
        else:
            # pow lowers to exp(g*log(u)); clamp so slightly-negative u doesn't NaN
            L = L * jnp.power(jnp.maximum(u, 0.0), gamma)

    if use_weights:
        L = L * w_ref[...].astype(jnp.float32)

    # element-wise accumulation into the resident output block (finalized by Pallas
    # write-back once per outer grid index; scalar reduction happens in the wrapper)
    out_ref[...] += L


def weighted_margin_loss(inputs, labels, class_weights=None, *, gamma=2.0,
                         size_average=False, loss_lambda=0.5, m_plus=0.9,
                         m_minus=0.1, block_rows=None, num_parallel=2,
                         vmem_budget_bytes=12 * 1024 * 1024):
    """inputs: [B, C]. labels: dense [B, C] (any float, incl. soft labels) or int
    class indices [B] (fast path, one-hot built in-kernel). class_weights: [C] or None."""
    B, C = inputs.shape
    n_elems = B * C

    labels_are_indices = (labels.ndim == 1)

    # lane-dense packing factor: fold k batch rows so the lane axis is a multiple of 128
    k = 128 // math.gcd(C, 128)
    if labels_are_indices and k > 32:
        # too many sub-rows to unroll the in-kernel one-hot; fall back to dense labels
        labels = jax.nn.one_hot(labels, C, dtype=inputs.dtype)
        labels_are_indices = False
    Cw = k * C
    idx_sentinel = -(Cw + 1)  # never matches any lane

    # --- pad batch to a multiple of k, then fold k rows into the lane axis -------
    Bp = _round_up(B, k)
    pad_b = Bp - B
    x = inputs
    if pad_b:
        x = jnp.pad(x, ((0, pad_b), (0, 0)))
    if labels_are_indices:
        lab = labels.astype(jnp.int32)
        if pad_b:
            lab = jnp.pad(lab, ((0, pad_b),), constant_values=idx_sentinel)
    else:
        lab = labels
        if pad_b:
            lab = jnp.pad(lab, ((0, pad_b), (0, 0)))
    # Zero-padded rows (x=0, y=0) contribute exactly 0 to the loss:
    #   y*relu(.9)^2 = 0, lambda*(1-y)*relu(-.1)^2 = 0, focal factor (1-pt)=0.
    R = Bp // k
    x2 = x.reshape(R, Cw)
    lab2 = lab.reshape(R, k) if labels_are_indices else lab.reshape(R, Cw)

    use_weights = class_weights is not None
    if use_weights:
        w2 = jnp.tile(jnp.asarray(class_weights, jnp.float32).reshape(1, C), (1, k))

    # --- pick a large row tile that fits the (double-buffered) VMEM budget -------
    itemsize_x = x2.dtype.itemsize
    itemsize_l = 0 if labels_are_indices else lab2.dtype.itemsize
    per_row = Cw * (2 * itemsize_x + 2 * itemsize_l + 2 * 4)  # 2-buf inputs + f32 out
    if labels_are_indices:
        per_row += 2 * k * 4
    if block_rows is None:
        tr = max(8, min(1024, (vmem_budget_bytes // per_row) // 8 * 8))
    else:
        tr = block_rows
    # don't give each core more than ~its share of rows (limits zero-padding)
    tr = min(tr, _round_up(-(-R // num_parallel), 8))

    Rp = _round_up(R, num_parallel * tr)
    pad_r = Rp - R
    if pad_r:
        x2 = jnp.pad(x2, ((0, pad_r), (0, 0)))
        if labels_are_indices:
            lab2 = jnp.pad(lab2, ((0, pad_r), (0, 0)), constant_values=idx_sentinel)
        else:
            lab2 = jnp.pad(lab2, ((0, pad_r), (0, 0)))

    n_i = Rp // (num_parallel * tr)
    grid = (num_parallel, n_i)
    row_map = lambda c, i: (c * n_i + i, 0)

    in_specs = [pl.BlockSpec((tr, Cw), row_map)]
    args = [x2]
    if labels_are_indices:
        in_specs.append(pl.BlockSpec((tr, k), row_map))
    else:
        in_specs.append(pl.BlockSpec((tr, Cw), row_map))
    args.append(lab2)
    if use_weights:
        in_specs.append(pl.BlockSpec((1, Cw), lambda c, i: (0, 0)))
        args.append(w2)

    kernel = functools.partial(
        _wml_kernel,
        gamma=float(gamma), loss_lambda=float(loss_lambda),
        m_plus=float(m_plus), m_minus=float(m_minus),
        use_weights=use_weights, labels_are_indices=labels_are_indices,
        num_classes=C, k=k)

    out = pl.pallas_call(
        kernel,
        out_shape=jax.ShapeDtypeStruct((num_parallel * tr, Cw), jnp.float32),
        grid_spec=pltpu.PrefetchScalarGridSpec(
            num_scalar_prefetch=0,
            grid=grid,
            in_specs=in_specs,
            # per-core accumulator block, revisited across the (arbitrary) inner axis
            out_specs=pl.BlockSpec((tr, Cw), lambda c, i: (c, 0)),
        ),
        compiler_params=pltpu.CompilerParams(
            dimension_semantics=("parallel", "arbitrary"),
            vmem_limit_bytes=32 * 1024 * 1024),
    )(*args)

    total = jnp.sum(out)  # tiny (num_parallel*tr, Cw) reduction done by XLA
    if size_average:
        total = total / jnp.float32(n_elems)  # matches torch .mean() over B*C elements
    return total


def _reference(inputs, labels, class_weights, *, gamma=2.0,
               size_average=False, loss_lambda=0.5):
    m_plus, m_minus = 0.9, 0.1
    x = inputs.astype(jnp.float32)
    y = labels.astype(jnp.float32)
    L = y * jnp.maximum(m_plus - x, 0.0) ** 2 \
        + loss_lambda * (1 - y) * jnp.maximum(x - m_minus, 0.0) ** 2
    if gamma > 0:
        pt = x * y + (1 - x) * (1 - y)
        L = L * (1 - pt) ** gamma
    if class_weights is not None:
        L = L * class_weights[None, :]
    return L.mean() if size_average else L.sum()


if __name__ == "__main__":
    key = jax.random.PRNGKey(0)
    B, C = 32, 16  # batch x num_classes (small test shape)

    k1, k2 = jax.random.split(key)
    inputs = jax.random.uniform(k1, (B, C), dtype=jnp.float32)   # capsule lengths in [0,1]
    cls = jax.random.randint(k2, (B,), 0, C)
    labels = jax.nn.one_hot(cls, C, dtype=jnp.float32)
    class_weights = jnp.linspace(0.5, 1.5, C, dtype=jnp.float32)

    ref = _reference(inputs, labels, class_weights,
                     gamma=2.0, size_average=False, loss_lambda=0.5)

    # 1) dense-label path (same interface/semantics as the PyTorch module)
    loss_dense = weighted_margin_loss(inputs, labels, class_weights,
                                      gamma=2.0, size_average=False, loss_lambda=0.5)
    loss_dense = jax.block_until_ready(loss_dense)
    assert jnp.allclose(loss_dense, ref, rtol=1e-5, atol=1e-5), (loss_dense, ref)

    # 2) index-label fast path (one-hot built in-kernel; halves HBM traffic)
    loss_idx = weighted_margin_loss(inputs, cls.astype(jnp.int32), class_weights,
                                    gamma=2.0, size_average=False, loss_lambda=0.5)
    loss_idx = jax.block_until_ready(loss_idx)
    assert jnp.allclose(loss_idx, ref, rtol=1e-5, atol=1e-5), (loss_idx, ref)

    # 3) no class weights + size_average
    ref2 = _reference(inputs, labels, None, gamma=2.0, size_average=True, loss_lambda=0.5)
    loss2 = weighted_margin_loss(inputs, labels, None,
                                 gamma=2.0, size_average=True, loss_lambda=0.5)
    loss2 = jax.block_until_ready(loss2)
    assert jnp.allclose(loss2, ref2, rtol=1e-5, atol=1e-5), (loss2, ref2)

    print("KERNEL_OK")
</pallas_src>

<mosaic_0001>
module attributes {stable_mosaic.version = 11 : i64} {
  func.func @_wml_kernel(%arg0: i32, %arg1: i32, %arg2: memref<8x128xf32, #tpu.memory_space<vmem>>, %arg3: memref<8x128xf32, #tpu.memory_space<vmem>>, %arg4: memref<1x128xf32, #tpu.memory_space<vmem>>, %arg5: memref<8x128xf32, #tpu.memory_space<vmem>>) attributes {dimension_semantics = [#tpu.dimension_semantics<parallel>, #tpu.dimension_semantics<arbitrary>], iteration_bounds = array<i64: 2, 1>, scalar_prefetch = 0 : i64, scratch_operands = 0 : i64, tpu.core_type = #tpu.core_type<tc>, window_params = [{transform_indices = @transform_0, window_bounds = array<i64: 8, 128>}, {transform_indices = @transform_1, window_bounds = array<i64: 8, 128>}, {pipeline_mode = #tpu.pipeline_mode<synchronous>, transform_indices = @transform_2, window_bounds = array<i64: 1, 128>}, {transform_indices = @transform_3, window_bounds = array<i64: 8, 128>}]} {
    %c0_i32 = arith.constant 0 : i32
    %0 = arith.cmpi eq, %arg1, %c0_i32 : i32
    %1 = arith.extui %0 : i1 to i32
    %c0_i32_0 = arith.constant 0 : i32
    %2 = arith.cmpi ne, %1, %c0_i32_0 : i32
    scf.if %2 {
      %cst_18 = arith.constant 0.000000e+00 : f32
      %39 = vector.broadcast %cst_18 : f32 to vector<8x128xf32>
      %c0_19 = arith.constant 0 : index
      %c0_20 = arith.constant 0 : index
      %40 = vector.load %arg5[%c0_19, %c0_20] : memref<8x128xf32, #tpu.memory_space<vmem>>, vector<8x128xf32>
      tpu.vector_store %arg5[%c0_19, %c0_20], %39 {strides = array<i32>} : memref<8x128xf32, #tpu.memory_space<vmem>>, vector<8x128xf32>,
    } else {
    }
    %c0 = arith.constant 0 : index
    %c0_1 = arith.constant 0 : index
    %3 = vector.load %arg2[%c0, %c0_1] : memref<8x128xf32, #tpu.memory_space<vmem>>, vector<8x128xf32>
    %c0_2 = arith.constant 0 : index
    %c0_3 = arith.constant 0 : index
    %4 = vector.load %arg3[%c0_2, %c0_3] : memref<8x128xf32, #tpu.memory_space<vmem>>, vector<8x128xf32>
    %cst = arith.constant 0.899999976 : f32
    %5 = vector.broadcast %cst : f32 to vector<8x128xf32>
    %6 = arith.subf %5, %3 : vector<8x128xf32>
    %cst_4 = arith.constant 0.000000e+00 : f32
    %7 = vector.broadcast %cst_4 : f32 to vector<8x128xf32>
    %8 = arith.maximumf %6, %7 : vector<8x128xf32>
    %cst_5 = arith.constant 1.000000e-01 : f32
    %9 = vector.broadcast %cst_5 : f32 to vector<8x128xf32>
    %10 = arith.subf %3, %9 : vector<8x128xf32>
    %cst_6 = arith.constant 0.000000e+00 : f32
    %11 = vector.broadcast %cst_6 : f32 to vector<8x128xf32>
    %12 = arith.maximumf %10, %11 : vector<8x128xf32>
    %13 = arith.mulf %8, %8 : vector<8x128xf32>
    %14 = arith.mulf %4, %13 : vector<8x128xf32>
    %cst_7 = arith.constant 1.000000e+00 : f32
    %15 = vector.broadcast %cst_7 : f32 to vector<8x128xf32>
    %16 = arith.subf %15, %4 : vector<8x128xf32>
    %cst_8 = arith.constant 5.000000e-01 : f32
    %17 = vector.broadcast %cst_8 : f32 to vector<8x128xf32>
    %18 = arith.mulf %17, %16 : vector<8x128xf32>
    %19 = arith.mulf %12, %12 : vector<8x128xf32>
    %20 = arith.mulf %18, %19 : vector<8x128xf32>
    %21 = arith.addf %14, %20 : vector<8x128xf32>
    %22 = arith.mulf %3, %4 : vector<8x128xf32>
    %cst_9 = arith.constant 1.000000e+00 : f32
    %23 = vector.broadcast %cst_9 : f32 to vector<8x128xf32>
    %24 = arith.subf %23, %3 : vector<8x128xf32>
    %cst_10 = arith.constant 1.000000e+00 : f32
    %25 = vector.broadcast %cst_10 : f32 to vector<8x128xf32>
    %26 = arith.subf %25, %4 : vector<8x128xf32>
    %27 = arith.mulf %24, %26 : vector<8x128xf32>
    %28 = arith.addf %22, %27 : vector<8x128xf32>
    %cst_11 = arith.constant 1.000000e+00 : f32
    %29 = vector.broadcast %cst_11 : f32 to vector<8x128xf32>
    %30 = arith.subf %29, %28 : vector<8x128xf32>
    %31 = arith.mulf %30, %30 : vector<8x128xf32>
    %32 = arith.mulf %21, %31 : vector<8x128xf32>
    %c0_12 = arith.constant 0 : index
    %c0_13 = arith.constant 0 : index
    %33 = vector.load %arg4[%c0_12, %c0_13] : memref<1x128xf32, #tpu.memory_space<vmem>>, vector<1x128xf32>
    %34 = vector.broadcast %33 : vector<1x128xf32> to vector<8x128xf32>
    %35 = arith.mulf %32, %34 : vector<8x128xf32>
    %c0_14 = arith.constant 0 : index
    %c0_15 = arith.constant 0 : index
    %36 = vector.load %arg5[%c0_14, %c0_15] : memref<8x128xf32, #tpu.memory_space<vmem>>, vector<8x128xf32>
    %37 = arith.addf %36, %35 : vector<8x128xf32>
    %c0_16 = arith.constant 0 : index
    %c0_17 = arith.constant 0 : index
    %38 = vector.load %arg5[%c0_16, %c0_17] : memref<8x128xf32, #tpu.memory_space<vmem>>, vector<8x128xf32>
    tpu.vector_store %arg5[%c0_16, %c0_17], %37 {strides = array<i32>} : memref<8x128xf32, #tpu.memory_space<vmem>>, vector<8x128xf32>,
    return
  }
  func.func @transform_0(%arg0: i32, %arg1: i32) -> (i32, i32) {
    %c1_i32 = arith.constant 1 : i32
    %0 = arith.muli %arg0, %c1_i32 : i32
    %1 = arith.addi %0, %arg1 : i32
    %c0_i32 = arith.constant 0 : i32
    %c0_i32_0 = arith.constant 0 : i32
    return %1, %c0_i32 : i32, i32
  }
  func.func @transform_1(%arg0: i32, %arg1: i32) -> (i32, i32) {
    %c1_i32 = arith.constant 1 : i32
    %0 = arith.muli %arg0, %c1_i32 : i32
    %1 = arith.addi %0, %arg1 : i32
    %c0_i32 = arith.constant 0 : i32
    %c0_i32_0 = arith.constant 0 : i32
    return %1, %c0_i32 : i32, i32
  }
  func.func @transform_2(%arg0: i32, %arg1: i32) -> (i32, i32) {
    %c0_i32 = arith.constant 0 : i32
    %c0_i32_0 = arith.constant 0 : i32
    %c0_i32_1 = arith.constant 0 : i32
    return %c0_i32, %c0_i32_0 : i32, i32
  }
  func.func @transform_3(%arg0: i32, %arg1: i32) -> (i32, i32) {
    %c0_i32 = arith.constant 0 : i32
    %c0_i32_0 = arith.constant 0 : i32
    return %arg0, %c0_i32 : i32, i32
  }
}

</mosaic_0001>

<llo_original>
// kernel: tpu_custom_call.1
$region0: #{tpu_custom_call.1}
  #allocation0 [shape = 'u32[]', space=smem, size = 0x4, offset = 0x4, fixed_abs, tag = 'smem constant byte address 0x4 - core index']
  #allocation1 [shape = 'u32[144,128]{1,0:T(1,128)}', space=vmem, size = 0x12000, scoped, tag = 'internal scratch']
  %s0 = inlined_call_operand.hbm [shape: f32[16,128], index: 0, kind: input, shape index: {}]
  %s1 = inlined_call_operand.hbm [shape: f32[16,128], index: 1, kind: input, shape index: {}]
  %s2 = inlined_call_operand.vmem [shape: f32[1,128], index: 2, kind: input, shape index: {}]
  %s3 = inlined_call_operand.hbm [shape: f32[16,128], index: 3, kind: output, shape index: {}]
  %s4 = sld [smem:[#allocation0]]
  $region57: #{tpu_custom_call.1} parent=0
    _
  %s6 = ssub.s32 1, %s4
  %s7 = scalar_select 0, %s6, %s4
  $region1: #{tpu_custom_call.1} parent=0
    #allocation2 [shape = 'u8[8192]{0}', space=vmem, size = 0x2000, scoped, tag = 'input window, operand 0']
    #allocation3 [shape = 's32[2]{0}', space=sflag, size = 0x8, scoped, tag = 'scoped memory for tpu_custom_call.1']
    #allocation4 [shape = 's32[2]{0}', space=sflag, size = 0x8, scoped, tag = 'scoped memory for tpu_custom_call.1']
    #allocation5 [shape = 'u8[8192]{0}', space=vmem, size = 0x2000, scoped, tag = 'input window, operand 1']
    #allocation6 [shape = 's32[2]{0}', space=sflag, size = 0x8, scoped, tag = 'scoped memory for tpu_custom_call.1']
    #allocation7 [shape = 'u8[8192]{0}', space=vmem, size = 0x2000, scoped, tag = 'output window, operand 0']
    %8 = vsyncpa [#allocation3], 0
    %s9 = scalar_lea.sflag [#allocation3], 1
    %10 = vsyncpa %s9, 0
    %11 = vsyncpa [#allocation6], 0
    %s12 = scalar_lea.sflag [#allocation6], 1
    %13 = vsyncpa %s12, 0
    %14 = vsyncpa [#allocation4], 0
    %s15 = scalar_lea.sflag [#allocation4], 1
    %16 = vsyncpa %s15, 0
    loop: start=0, step=1, limit=4
    $region2: #{tpu_custom_call.1} parent=1 // loop_pre_header
      _
    $region3: #{tpu_custom_call.1} parent=1 // loop_header
      %s18 = sphi 0, %s22
      %p19 = scmp.ge.s32.totalorder %s18, 4
      %s25 = sphi 0, %s37
      %s26 = sphi 0, %s33
      %s27 = sphi 0, %s25
      %s28 = sphi 0, %s26
      %s29 = sphi 0, %s27
      %s30 = sphi 0, %s28
      %s42 = sphi 0, %s44
      %s45 = sphi 0, %s42
      %s46 = sphi 0, %s45
      %s62 = sphi 0, %s46
      %s70 = sphi 0, %s72
      %s73 = sphi 0, %s70
      %s74 = sphi 0, %s73
      %s90 = sphi 0, %s74
      %s94 = sphi 0, %s94
      %s96 = sphi 0, %s94
      %s97 = sphi 0, %s96
      %s111 = sphi 0, %s97
      %s117 = sphi 0, %s119
      %s120 = sphi 0, %s117
      %s121 = sphi 0, %s120
      %s137 = sphi 0, %s121
    $region4: #{tpu_custom_call.1} parent=1 // loop_header_branch
      %21 = sbr.rel (%p19) target = $region8
    $region5: #{tpu_custom_call.1} parent=1 // loop_body
      %s23 = ssub.s32 %s18, 1
      %s24 = ssub.s32 %s18, 2
      %s31 = sadd.s32 1, %s26
      %p32 = scmp.ge.s32.totalorder %s31, 1
      %s33 = scalar_select %p32, 0, %s31
      %s34 = sadd.s32 1, %s25
      %s35 = scalar_select %p32, %s34, %s25
      %p36 = scmp.ge.s32.totalorder %s35, 2
      %s37 = scalar_select %p36, 0, %s35
      %s38 = sadd.s32 %s25, %s26
      %s39 = sadd.s32 %s37, %s33
      %s40 = ssub.s32 %s38, %s39
      %p41 = scmp.eq.s32.totalorder %s40, 0
      %s43 = sadd.s32 %s42, 1
      %s44 = scalar_select %p41, %s42, %s43
      %p47 = pneg %p41
      %p48 = scmp.eq.s32.totalorder %s18, 1
      %p49 = por %p47, %p48
      %p50 = scmp.ne.s32.totalorder %s42, %s45
      %p51 = scmp.eq.s32.totalorder %s18, 0
      %p52 = por %p50, %p51
      %p53 = scmp.ne.s32.totalorder %s42, %s45
      %p54 = scmp.eq.s32.totalorder %s23, 1
      %p55 = por %p53, %p54
      %p56 = scmp.ne.s32.totalorder %s45, %s46
      %p57 = scmp.eq.s32.totalorder %s23, 0
      %p58 = por %p56, %p57
      %p59 = scmp.ne.s32.totalorder %s45, %s46
      %p60 = scmp.eq.s32.totalorder %s24, 1
      %p61 = por %p59, %p60
      %p63 = scmp.ne.s32.totalorder %s46, %s62
      %p64 = scmp.eq.s32.totalorder %s24, 0
      %p65 = por %p63, %p64
      %s66 = sadd.s32 %s25, %s26
      %s67 = sadd.s32 %s37, %s33
      %s68 = ssub.s32 %s66, %s67
      %p69 = scmp.eq.s32.totalorder %s68, 0
      %s71 = sadd.s32 %s70, 1
      %s72 = scalar_select %p69, %s70, %s71
      %p75 = pneg %p69
      %p76 = scmp.eq.s32.totalorder %s18, 1
      %p77 = por %p75, %p76
      %p78 = scmp.ne.s32.totalorder %s70, %s73
      %p79 = scmp.eq.s32.totalorder %s18, 0
      %p80 = por %p78, %p79
      %p81 = scmp.ne.s32.totalorder %s70, %s73
      %p82 = scmp.eq.s32.totalorder %s23, 1
      %p83 = por %p81, %p82
      %p84 = scmp.ne.s32.totalorder %s73, %s74
      %p85 = scmp.eq.s32.totalorder %s23, 0
      %p86 = por %p84, %p85
      %p87 = scmp.ne.s32.totalorder %s73, %s74
      %p88 = scmp.eq.s32.totalorder %s24, 1
      %p89 = por %p87, %p88
      %p91 = scmp.ne.s32.totalorder %s74, %s90
      %p92 = scmp.eq.s32.totalorder %s24, 0
      %p93 = por %p91, %p92
      %s95 = sadd.s32 %s94, 1
      %p98 = scmp.eq.s32.totalorder %s18, 1
      %p99 = scmp.ne.s32.totalorder %s94, %s96
      %p100 = scmp.eq.s32.totalorder %s18, 0
      %p101 = por %p99, %p100
      %p102 = scmp.ne.s32.totalorder %s94, %s96
      %p103 = scmp.eq.s32.totalorder %s23, 1
      %p104 = por %p102, %p103
      %p105 = scmp.ne.s32.totalorder %s96, %s97
      %p106 = scmp.eq.s32.totalorder %s23, 0
      %p107 = por %p105, %p106
      %p108 = scmp.ne.s32.totalorder %s96, %s97
      %p109 = scmp.eq.s32.totalorder %s24, 1
      %p110 = por %p108, %p109
      %p112 = scmp.ne.s32.totalorder %s97, %s111
      %p113 = scmp.eq.s32.totalorder %s24, 0
      %p114 = por %p112, %p113
      %s115 = ssub.s32 %s25, %s37
      %p116 = scmp.eq.s32.totalorder %s115, 0
      %s118 = sadd.s32 %s117, 1
      %s119 = scalar_select %p116, %s117, %s118
      %p122 = pneg %p116
      %p123 = scmp.eq.s32.totalorder %s18, 1
      %p124 = por %p122, %p123
      %p125 = scmp.ne.s32.totalorder %s117, %s120
      %p126 = scmp.eq.s32.totalorder %s18, 0
      %p127 = por %p125, %p126
      %p128 = scmp.ne.s32.totalorder %s117, %s120
      %p129 = scmp.eq.s32.totalorder %s23, 1
      %p130 = por %p128, %p129
      %p131 = scmp.ne.s32.totalorder %s120, %s121
      %p132 = scmp.eq.s32.totalorder %s23, 0
      %p133 = por %p131, %p132
      %p134 = scmp.ne.s32.totalorder %s120, %s121
      %p135 = scmp.eq.s32.totalorder %s24, 1
      %p136 = por %p134, %p135
      %p138 = scmp.ne.s32.totalorder %s121, %s137
      %p139 = scmp.eq.s32.totalorder %s24, 0
      %p140 = por %p138, %p139
      %p141 = scmp.le.s32.totalorder 1, %s18
      %p142 = scmp.lt.s32.totalorder %s18, 3
      %p143 = pnand %p141, %p142
      %p144 = pneg %p143
      // Predicated region
      $region9: #{tpu_custom_call.1} parent=5 // pred_check
        _
      $region10: #{tpu_custom_call.1} parent=5 // pred_check_branch
        %146 = sbr.rel (%p143) target = $region12
      $region11: #{tpu_custom_call.1} parent=5 // pred_region
        %s147 = ssub.s32 %s18, 1
        // Predicated region
        $region13: #{tpu_custom_call.1} parent=11 // pred_check
          %p148 = pneg %p107
        $region14: #{tpu_custom_call.1} parent=11 // pred_check_branch
          %150 = sbr.rel (%p148) target = $region16
        $region15: #{tpu_custom_call.1} parent=11 // pred_region
          _
        $region16: #{tpu_custom_call.1} parent=11 // pred_fallthru
          _
      $region12: #{tpu_custom_call.1} parent=5 // pred_fallthru
        _
      %p151 = scmp.lt.s32.totalorder %s18, 2
      // Predicated region
      $region17: #{tpu_custom_call.1} parent=5 // pred_check
        %p152 = pneg %p151
      $region18: #{tpu_custom_call.1} parent=5 // pred_check_branch
        %154 = sbr.rel (%p152) target = $region20
      $region19: #{tpu_custom_call.1} parent=5 // pred_region
        // Predicated region
        $region21: #{tpu_custom_call.1} parent=19 // pred_check
          %p155 = pneg %p52
        $region22: #{tpu_custom_call.1} parent=19 // pred_check_branch
          %157 = sbr.rel (%p155) target = $region24
        $region23: #{tpu_custom_call.1} parent=19 // pred_region
          %s158 = sand.u32 %s42, 1
          %s159 = scalar_lea.sflag [#allocation3], %s158
          %s160 = sand.u32 %s42, 1
          %s161 = smul.addr %s160, 8
          %s162 = scalar_lea.vmem [#allocation2], %s161
          %s163 = sadd.s32 %s25, %s26
          %s165 = ssub.s32 128, 128
          %166 = vsyncadd %s159, %s165
          %s167 = smul.addr %s163, 128
          %s168 = scalar_lea.hbm %s0, %s167
          %s170 = sshll.u32 %s162, 4
          %s171 = int_to_ptr.vmem [resolvable:$true] %s170
          %173 = dma.hbm_to_vmem [thread:$0]  %s168, 128, %s171, %s159
        $region24: #{tpu_custom_call.1} parent=19 // pred_fallthru
          _
        // Predicated region
        $region25: #{tpu_custom_call.1} parent=19 // pred_check
          %p174 = pneg %p80
        $region26: #{tpu_custom_call.1} parent=19 // pred_check_branch
          %176 = sbr.rel (%p174) target = $region28
        $region27: #{tpu_custom_call.1} parent=19 // pred_region
          %s177 = sand.u32 %s70, 1
          %s178 = scalar_lea.sflag [#allocation6], %s177
          %s179 = sand.u32 %s70, 1
          %s180 = smul.addr %s179, 8
          %s181 = scalar_lea.vmem [#allocation5], %s180
          %s182 = sadd.s32 %s25, %s26
          %s184 = ssub.s32 128, 128
          %185 = vsyncadd %s178, %s184
          %s186 = smul.addr %s182, 128
          %s187 = scalar_lea.hbm %s1, %s186
          %s189 = sshll.u32 %s181, 4
          %s190 = int_to_ptr.vmem [resolvable:$true] %s189
          %192 = dma.hbm_to_vmem [thread:$0]  %s187, 128, %s190, %s178
        $region28: #{tpu_custom_call.1} parent=19 // pred_fallthru
          _
      $region20: #{tpu_custom_call.1} parent=5 // pred_fallthru
        _
      %p193 = scmp.le.s32.totalorder 1, %s18
      %p194 = scmp.lt.s32.totalorder %s18, 3
      %p195 = pnand %p193, %p194
      %p196 = pneg %p195
      // Predicated region
      $region29: #{tpu_custom_call.1} parent=5 // pred_check
        _
      $region30: #{tpu_custom_call.1} parent=5 // pred_check_branch
        %198 = sbr.rel (%p195) target = $region32
      $region31: #{tpu_custom_call.1} parent=5 // pred_region
        %s199 = ssub.s32 %s18, 1
        %s200 = sand.u32 %s45, 1
        %s201 = scalar_lea.sflag [#allocation3], %s200
        %s202 = sand.u32 %s45, 1
        %s203 = smul.addr %s202, 8
        %s204 = scalar_lea.vmem [#allocation2], %s203
        // Predicated region
        $region33: #{tpu_custom_call.1} parent=31 // pred_check
          %p205 = pneg %p58
        $region34: #{tpu_custom_call.1} parent=31 // pred_check_branch
          %207 = sbr.rel (%p205) target = $region36
        $region35: #{tpu_custom_call.1} parent=31 // pred_region
          %208 = dma.done %s201, 128
        $region36: #{tpu_custom_call.1} parent=31 // pred_fallthru
          _
        %s209 = sand.u32 %s73, 1
        %s210 = scalar_lea.sflag [#allocation6], %s209
        %s211 = sand.u32 %s73, 1
        %s212 = smul.addr %s211, 8
        %s213 = scalar_lea.vmem [#allocation5], %s212
        // Predicated region
        $region37: #{tpu_custom_call.1} parent=31 // pred_check
          %p214 = pneg %p86
        $region38: #{tpu_custom_call.1} parent=31 // pred_check_branch
          %216 = sbr.rel (%p214) target = $region40
        $region39: #{tpu_custom_call.1} parent=31 // pred_region
          %217 = dma.done %s210, 128
        $region40: #{tpu_custom_call.1} parent=31 // pred_fallthru
          _
        %s218 = sand.u32 %s45, 1
        %s219 = scalar_lea.sflag [#allocation3], %s218
        %s220 = sand.u32 %s45, 1
        %s221 = smul.addr %s220, 8
        %s222 = scalar_lea.vmem [#allocation2], %s221
        %p223 = pneg %p58
        %p224 = pneg %p55
        %s225 = sand.u32 %s73, 1
        %s226 = scalar_lea.sflag [#allocation6], %s225
        %s227 = sand.u32 %s73, 1
        %s228 = smul.addr %s227, 8
        %s229 = scalar_lea.vmem [#allocation5], %s228
        %p230 = pneg %p86
        %p231 = pneg %p83
        %p232 = pneg %p107
        %p233 = pneg %p104
        %p234 = pneg %p133
        %p235 = pneg %p130
        %s236 = sand.u32 %s120, 1
        %s237 = scalar_lea.sflag [#allocation4], %s236
        %s238 = sand.u32 %s120, 1
        %s239 = smul.addr %s238, 8
        %s240 = scalar_lea.vmem [#allocation7], %s239
        %s241 = sadd.s32 %s27, %s28
        %s242 = sadd.s32 %s27, %s28
        %p243 = scmp.eq.s32.totalorder %s28, 0
        // Predicated region
        $region41: #{tpu_custom_call.1} parent=31 // pred_check
          %p244 = pneg %p243
        $region42: #{tpu_custom_call.1} parent=31 // pred_check_branch
          %246 = sbr.rel (%p244) target = $region44
        $region43: #{tpu_custom_call.1} parent=31 // pred_region
          %247 = vst [vmem:[%s240] sm:$0xff] 0.0
        $region44: #{tpu_custom_call.1} parent=31 // pred_fallthru
          _
        %v248 = vld [vmem:[%s204] sm:$0xff]
        %v249 = vld [vmem:[%s213] sm:$0xff]
        %v250 = vsub.f32 0.9, %v248
        %v251 = vmax.f32 %v250, 0.0
        %v252 = vsub.f32 %v248, 0.1
        %v253 = vmax.f32 %v252, 0.0
        %v254 = vmul.f32 %v251, %v251
        %v255 = vmul.f32 %v249, %v254
        %v256 = vsub.f32 1.0, %v249
        %v257 = vmul.f32 %v256, 0.5
        %v258 = vmul.f32 %v253, %v253
        %v259 = vmul.f32 %v257, %v258
        %v260 = vadd.f32 %v255, %v259
        %v261 = vmul.f32 %v248, %v249
        %v262 = vsub.f32 1.0, %v248
        %v263 = vmul.f32 %v262, %v256
        %v264 = vadd.f32 %v261, %v263
        %v265 = vsub.f32 1.0, %v264
        %v266 = vmul.f32 %v265, %v265
        %v267 = vmul.f32 %v260, %v266
        %v268 = vld [vmem:[%s2] sm:$0x1]
        %v270 = vlaneseq
        %v271 = vshrl.u32 %v270, 7
        %v272 = vsub.s32 0, %v271
        %v273 = vrot.slane %v268, %v272
        %v275 = vmul.f32 %v267, %v273
        %v276 = vld [vmem:[%s240] sm:$0xff]
        %v277 = vadd.f32 %v276, %v275
        %278 = vst [vmem:[%s240] sm:$0xff] %v277
        %s279 = sand.u32 %s120, 1
        %s280 = scalar_lea.sflag [#allocation4], %s279
        %s281 = sand.u32 %s120, 1
        %s282 = smul.addr %s281, 8
        %s283 = scalar_lea.vmem [#allocation7], %s282
        // Predicated region
        $region45: #{tpu_custom_call.1} parent=31 // pred_check
          %p284 = pneg %p130
        $region46: #{tpu_custom_call.1} parent=31 // pred_check_branch
          %286 = sbr.rel (%p284) target = $region48
        $region47: #{tpu_custom_call.1} parent=31 // pred_region
          %s288 = ssub.s32 128, 128
          %289 = vsyncadd %s280, %s288
          %s290 = smul.addr %s27, 128
          %s291 = scalar_lea.hbm %s3, %s290
          %s293 = sshll.u32 %s283, 4
          %s294 = int_to_ptr.vmem [resolvable:$true] %s293
          %296 = dma.vmem_to_hbm [thread:$0]  %s294, 128, %s291, %s280
        $region48: #{tpu_custom_call.1} parent=31 // pred_fallthru
          _
      $region32: #{tpu_custom_call.1} parent=5 // pred_fallthru
        _
      %p297 = scmp.le.s32.totalorder 2, %s18
      // Predicated region
      $region49: #{tpu_custom_call.1} parent=5 // pred_check
        %p298 = pneg %p297
      $region50: #{tpu_custom_call.1} parent=5 // pred_check_branch
        %300 = sbr.rel (%p298) target = $region52
      $region51: #{tpu_custom_call.1} parent=5 // pred_region
        %s301 = ssub.s32 %s18, 2
        // Predicated region
        $region53: #{tpu_custom_call.1} parent=51 // pred_check
          %p302 = pneg %p136
        $region54: #{tpu_custom_call.1} parent=51 // pred_check_branch
          %304 = sbr.rel (%p302) target = $region56
        $region55: #{tpu_custom_call.1} parent=51 // pred_region
          %s305 = sand.u32 %s121, 1
          %s306 = scalar_lea.sflag [#allocation4], %s305
          %s307 = sand.u32 %s121, 1
          %s308 = smul.addr %s307, 8
          %s309 = scalar_lea.vmem [#allocation7], %s308
          %310 = dma.done %s306, 128
        $region56: #{tpu_custom_call.1} parent=51 // pred_fallthru
          _
      $region52: #{tpu_custom_call.1} parent=5 // pred_fallthru
        _
    $region6: #{tpu_custom_call.1} parent=1 // loop_footer
      %s22 = sadd.s32 1, %s18
    $region7: #{tpu_custom_call.1} parent=1 // loop_footer_branch
      %17 = sbr.rel target = $region3
    $region8: #{tpu_custom_call.1} parent=1 // loop_exit
      _
    %311 = vsyncpa [#allocation3], 1
    %s312 = scalar_lea.sflag [#allocation3], 1
    %313 = vsyncpa %s312, 1
    %314 = vsyncpa [#allocation6], 1
    %s315 = scalar_lea.sflag [#allocation6], 1
    %316 = vsyncpa %s315, 1
    %317 = vsyncpa [#allocation4], 1
    %s318 = scalar_lea.sflag [#allocation4], 1
    %319 = vsyncpa %s318, 1

</llo_original>
